<compile_context>
chip_gen: v7x
topology: tpu7x:2x2x1
jax: 0.10.0
libtpu: 0.0.40
codegen_flags: <defaults>
</compile_context>

<pallas_src>
import jax
import jax.numpy as jnp
from jax.experimental import pallas as pl
from jax.experimental.pallas import tpu as pltpu


# ----------------------------------------------------------------------------- kernel

def _msca_kernel(x_ref, xg_ref, w1t_ref, b1_ref, w2t_ref, b2_ref, o_ref):
    # x_ref : (1, C, TR)  channel-first tile, HW on lanes (native dtype)
    # xg_ref: (1, C, 1)   f32 global-branch output for this batch element
    # w1t   : (Cmid, C), b1: (Cmid, 1), w2t: (C, Cmid), b2: (C, 1)   BN-folded
    # o_ref : (1, C, TR)
    x = x_ref[0]                                                   # straight to MXU

    h = jnp.dot(w1t_ref[...], x, preferred_element_type=jnp.float32) + b1_ref[...]
    h = jnp.maximum(h, 0.0)                                        # (Cmid, TR) f32

    xl = jnp.dot(w2t_ref[...], h.astype(w2t_ref.dtype),
                 preferred_element_type=jnp.float32) + b2_ref[...]  # (C, TR) f32

    o_ref[0] = jax.nn.sigmoid(xl + xg_ref[0]).astype(o_ref.dtype)


# ----------------------------------------------------------------------------- wrapper

def _pick_row_tile(hw):
    """Lane-dense HW tile: 512 for big maps, rounded-up-to-128 (or full) otherwise."""
    if hw <= 128:
        return hw                              # full-extent block (equals array dim)
    return min(512, pl.cdiv(hw, 128) * 128)    # ragged tail handled by Pallas


def _fold_conv_bn(w, b, gamma, beta, mean, var, eps):
    """Fold Conv2d(1x1, bias) + BatchNorm2d (eval) into y = W_eff @ x + b_eff.

    Returns W_eff of shape (Cout, Cin) (channel-first orientation) and
    b_eff of shape (Cout, 1).
    """
    s = gamma / jnp.sqrt(var + eps)                                # (Cout,)
    w_eff = (w[:, :, 0, 0] * s[:, None]).astype(jnp.float32)       # (Cout, Cin)
    b_eff = ((b - mean) * s + beta).astype(jnp.float32)
    return w_eff, b_eff.reshape(-1, 1)


def msca_forward(x_nchw, params, eps=1e-5):
    """Forward of MSCA. x_nchw: (N, C, H, W). Returns sigmoid attention weights, NCHW."""
    N, C, H, W = x_nchw.shape
    HW = H * W
    itemsize = jnp.dtype(x_nchw.dtype).itemsize

    # --- plain-JAX glue: channel-first layout (pure reshape, no transpose) ---
    x_r = x_nchw.reshape(N, C, HW)

    # --- BN folding ---
    w1t, b1 = _fold_conv_bn(params["l_w1"], params["l_b1"], *params["l_bn1"], eps)
    w2t, b2 = _fold_conv_bn(params["l_w2"], params["l_b2"], *params["l_bn2"], eps)
    gw1t, gb1 = _fold_conv_bn(params["g_w1"], params["g_b1"], *params["g_bn1"], eps)
    gw2t, gb2 = _fold_conv_bn(params["g_w2"], params["g_b2"], *params["g_bn2"], eps)
    Cmid = w1t.shape[0]

    # Match conv-weight dtype to the activations (bf16 MXU fast path when x is bf16);
    # biases stay f32 (added on the f32 accumulator).
    w1t = w1t.astype(x_nchw.dtype)
    w2t = w2t.astype(x_nchw.dtype)

    # --- global branch: GAP + tiny 64->16->64 MLP on a per-batch vector.
    # XLA's reduce reads x at HBM roofline; everything else is negligible, so a
    # dedicated Pallas pooling pass is pure overhead (per perf review). ---
    pooled = jnp.mean(x_r.astype(jnp.float32), axis=-1)                     # (N, C)
    gh = jnp.einsum("nc,oc->no", pooled, gw1t,
                    precision=jax.lax.Precision.HIGHEST) + gb1.reshape(1, -1)
    gh = jnp.maximum(gh, 0.0)                                               # (N, Cmid)
    xg = jnp.einsum("nm,om->no", gh, gw2t,
                    precision=jax.lax.Precision.HIGHEST) + gb2.reshape(1, -1)
    xg = xg.reshape(N, C, 1).astype(jnp.float32)                            # (N, C, 1)

    # --- local branch + add xg + sigmoid: single Pallas pass ---
    TR = _pick_row_tile(HW)
    n_t = pl.cdiv(HW, TR)
    rep2 = lambda n, t: (0, 0)   # grid-invariant weights/biases

    out = pl.pallas_call(
        _msca_kernel,
        out_shape=jax.ShapeDtypeStruct((N, C, HW), x_nchw.dtype),
        grid_spec=pltpu.PrefetchScalarGridSpec(
            num_scalar_prefetch=0,
            grid=(N, n_t),
            in_specs=[
                pl.BlockSpec((1, C, TR), lambda n, t: (n, 0, t)),   # x tile
                pl.BlockSpec((1, C, 1), lambda n, t: (n, 0, 0)),    # xg (per batch)
                pl.BlockSpec(w1t.shape, rep2),
                pl.BlockSpec(b1.shape, rep2),
                pl.BlockSpec(w2t.shape, rep2),
                pl.BlockSpec(b2.shape, rep2),
            ],
            out_specs=pl.BlockSpec((1, C, TR), lambda n, t: (n, 0, t)),
        ),
        compiler_params=pltpu.CompilerParams(
            dimension_semantics=("parallel", "parallel")),
        cost_estimate=pl.CostEstimate(
            flops=4 * N * HW * C * Cmid,
            transcendentals=N * HW * C,
            bytes_accessed=2 * N * HW * C * itemsize
                           + 4 * N * C + 2 * C * Cmid * itemsize),
    )(x_r, xg, w1t, b1, w2t, b2)

    return out.reshape(N, C, H, W)   # pure reshape back to NCHW


# ----------------------------------------------------------------------------- reference

def _msca_reference(x, p, eps=1e-5):
    def conv1x1(z, w, b):
        return jnp.einsum("nihw,oi->nohw", z, w[:, :, 0, 0]) + b.reshape(1, -1, 1, 1)

    def bn(z, gamma, beta, mean, var):
        s = (gamma / jnp.sqrt(var + eps)).reshape(1, -1, 1, 1)
        return (z - mean.reshape(1, -1, 1, 1)) * s + beta.reshape(1, -1, 1, 1)

    xl = jnp.maximum(bn(conv1x1(x, p["l_w1"], p["l_b1"]), *p["l_bn1"]), 0.0)
    xl = bn(conv1x1(xl, p["l_w2"], p["l_b2"]), *p["l_bn2"])

    xg = jnp.mean(x, axis=(2, 3), keepdims=True)
    xg = jnp.maximum(bn(conv1x1(xg, p["g_w1"], p["g_b1"]), *p["g_bn1"]), 0.0)
    xg = bn(conv1x1(xg, p["g_w2"], p["g_b2"]), *p["g_bn2"])

    return jax.nn.sigmoid(xl + xg)


# ----------------------------------------------------------------------------- test

if __name__ == "__main__":
    key = jax.random.PRNGKey(0)
    keys = list(jax.random.split(key, 32))
    ki = iter(keys)

    # MSCA(channels=64, r=4)
    N, C, H, W = 2, 64, 16, 16
    Cmid = C // 4

    def bn_params(c):
        gamma = 1.0 + 0.1 * jax.random.normal(next(ki), (c,), jnp.float32)
        beta = 0.1 * jax.random.normal(next(ki), (c,), jnp.float32)
        mean = 0.1 * jax.random.normal(next(ki), (c,), jnp.float32)
        var = jax.random.uniform(next(ki), (c,), jnp.float32, minval=0.5, maxval=1.5)
        return (gamma, beta, mean, var)

    x = jax.random.normal(next(ki), (N, C, H, W), jnp.float32)
    params = {
        "l_w1": 0.1 * jax.random.normal(next(ki), (Cmid, C, 1, 1), jnp.float32),
        "l_b1": 0.1 * jax.random.normal(next(ki), (Cmid,), jnp.float32),
        "l_bn1": bn_params(Cmid),
        "l_w2": 0.1 * jax.random.normal(next(ki), (C, Cmid, 1, 1), jnp.float32),
        "l_b2": 0.1 * jax.random.normal(next(ki), (C,), jnp.float32),
        "l_bn2": bn_params(C),
        "g_w1": 0.1 * jax.random.normal(next(ki), (Cmid, C, 1, 1), jnp.float32),
        "g_b1": 0.1 * jax.random.normal(next(ki), (Cmid,), jnp.float32),
        "g_bn1": bn_params(Cmid),
        "g_w2": 0.1 * jax.random.normal(next(ki), (C, Cmid, 1, 1), jnp.float32),
        "g_b2": 0.1 * jax.random.normal(next(ki), (C,), jnp.float32),
        "g_bn2": bn_params(C),
    }

    out = msca_forward(x, params)
    out = jax.block_until_ready(out)

    ref = _msca_reference(x, params)
    assert out.shape == (N, C, H, W), out.shape
    max_err = float(jnp.max(jnp.abs(out - ref)))
    assert jnp.allclose(out, ref, atol=1e-5, rtol=1e-5), max_err

    print("KERNEL_OK")
</pallas_src>

<mosaic_0001>
module attributes {stable_mosaic.version = 11 : i64} {
  func.func @_msca_kernel(%arg0: i32, %arg1: i32, %arg2: memref<1x64x256xf32, #tpu.memory_space<vmem>>, %arg3: memref<1x64x1xf32, #tpu.memory_space<vmem>>, %arg4: memref<16x64xf32, #tpu.memory_space<vmem>>, %arg5: memref<16x1xf32, #tpu.memory_space<vmem>>, %arg6: memref<64x16xf32, #tpu.memory_space<vmem>>, %arg7: memref<64x1xf32, #tpu.memory_space<vmem>>, %arg8: memref<1x64x256xf32, #tpu.memory_space<vmem>>) attributes {dimension_semantics = [#tpu.dimension_semantics<parallel>, #tpu.dimension_semantics<parallel>], iteration_bounds = array<i64: 2, 1>, scalar_prefetch = 0 : i64, scratch_operands = 0 : i64, tpu.core_type = #tpu.core_type<tc>, window_params = [{transform_indices = @transform_0, window_bounds = array<i64: 1, 64, 256>}, {transform_indices = @transform_1, window_bounds = array<i64: 1, 64, 1>}, {pipeline_mode = #tpu.pipeline_mode<synchronous>, transform_indices = @transform_2, window_bounds = array<i64: 16, 64>}, {pipeline_mode = #tpu.pipeline_mode<synchronous>, transform_indices = @transform_3, window_bounds = array<i64: 16, 1>}, {pipeline_mode = #tpu.pipeline_mode<synchronous>, transform_indices = @transform_4, window_bounds = array<i64: 64, 16>}, {pipeline_mode = #tpu.pipeline_mode<synchronous>, transform_indices = @transform_5, window_bounds = array<i64: 64, 1>}, {transform_indices = @transform_6, window_bounds = array<i64: 1, 64, 256>}]} {
    %c0 = arith.constant 0 : index
    %c0_0 = arith.constant 0 : index
    %c0_1 = arith.constant 0 : index
    %0 = vector.load %arg2[%c0, %c0_0, %c0_1] : memref<1x64x256xf32, #tpu.memory_space<vmem>>, vector<1x64x256xf32>
    %1 = vector.shape_cast %0 : vector<1x64x256xf32> to vector<64x256xf32>
    %c0_2 = arith.constant 0 : index
    %c0_3 = arith.constant 0 : index
    %2 = vector.load %arg4[%c0_2, %c0_3] : memref<16x64xf32, #tpu.memory_space<vmem>>, vector<16x64xf32>
    %cst = arith.constant dense<0.000000e+00> : vector<16x256xf32>
    %3 = tpu.matmul %2, %1, %cst {dimension_numbers = #tpu.dot_dimension_numbers<[1], [0], [0], [1], [0, 0, 1, 1], [], []>} : vector<16x64xf32>, vector<64x256xf32>, vector<16x256xf32> -> vector<16x256xf32>
    %c0_4 = arith.constant 0 : index
    %c0_5 = arith.constant 0 : index
    %4 = vector.load %arg5[%c0_4, %c0_5] : memref<16x1xf32, #tpu.memory_space<vmem>>, vector<16x1xf32>
    %5 = vector.broadcast %4 : vector<16x1xf32> to vector<16x256xf32>
    %6 = arith.addf %3, %5 : vector<16x256xf32>
    %cst_6 = arith.constant 0.000000e+00 : f32
    %7 = vector.broadcast %cst_6 : f32 to vector<16x256xf32>
    %8 = arith.maximumf %6, %7 : vector<16x256xf32>
    %c0_7 = arith.constant 0 : index
    %c0_8 = arith.constant 0 : index
    %9 = vector.load %arg6[%c0_7, %c0_8] : memref<64x16xf32, #tpu.memory_space<vmem>>, vector<64x16xf32>
    %cst_9 = arith.constant dense<0.000000e+00> : vector<64x256xf32>
    %10 = tpu.matmul %9, %8, %cst_9 {dimension_numbers = #tpu.dot_dimension_numbers<[1], [0], [0], [1], [0, 0, 1, 1], [], []>} : vector<64x16xf32>, vector<16x256xf32>, vector<64x256xf32> -> vector<64x256xf32>
    %c0_10 = arith.constant 0 : index
    %c0_11 = arith.constant 0 : index
    %11 = vector.load %arg7[%c0_10, %c0_11] : memref<64x1xf32, #tpu.memory_space<vmem>>, vector<64x1xf32>
    %12 = vector.broadcast %11 : vector<64x1xf32> to vector<64x256xf32>
    %13 = arith.addf %10, %12 : vector<64x256xf32>
    %c0_12 = arith.constant 0 : index
    %c0_13 = arith.constant 0 : index
    %c0_14 = arith.constant 0 : index
    %14 = vector.load %arg3[%c0_12, %c0_13, %c0_14] : memref<1x64x1xf32, #tpu.memory_space<vmem>>, vector<1x64x1xf32>
    %15 = vector.shape_cast %14 : vector<1x64x1xf32> to vector<64x1xf32>
    %16 = vector.broadcast %15 : vector<64x1xf32> to vector<64x256xf32>
    %17 = arith.addf %13, %16 : vector<64x256xf32>
    %18 = arith.negf %17 : vector<64x256xf32>
    %19 = math.exp %18 : vector<64x256xf32>
    %cst_15 = arith.constant 1.000000e+00 : f32
    %20 = vector.broadcast %cst_15 : f32 to vector<64x256xf32>
    %21 = arith.addf %20, %19 : vector<64x256xf32>
    %22 = arith.divf %20, %21 : vector<64x256xf32>
    %c0_16 = arith.constant 0 : index
    %c0_17 = arith.constant 0 : index
    %c0_18 = arith.constant 0 : index
    %23 = vector.load %arg8[%c0_16, %c0_17, %c0_18] : memref<1x64x256xf32, #tpu.memory_space<vmem>>, vector<1x64x256xf32>
    %24 = vector.shape_cast %23 : vector<1x64x256xf32> to vector<64x256xf32>
    %25 = vector.shape_cast %22 : vector<64x256xf32> to vector<1x64x256xf32>
    tpu.vector_store %arg8[%c0_16, %c0_17, %c0_18], %25 {strides = array<i32>} : memref<1x64x256xf32, #tpu.memory_space<vmem>>, vector<1x64x256xf32>,
    return
  }
  func.func @transform_0(%arg0: i32, %arg1: i32) -> (i32, i32, i32) {
    %c0_i32 = arith.constant 0 : i32
    %c0_i32_0 = arith.constant 0 : i32
    return %arg0, %c0_i32, %arg1 : i32, i32, i32
  }
  func.func @transform_1(%arg0: i32, %arg1: i32) -> (i32, i32, i32) {
    %c0_i32 = arith.constant 0 : i32
    %c0_i32_0 = arith.constant 0 : i32
    %c0_i32_1 = arith.constant 0 : i32
    return %arg0, %c0_i32, %c0_i32_0 : i32, i32, i32
  }
  func.func @transform_2(%arg0: i32, %arg1: i32) -> (i32, i32) {
    %c0_i32 = arith.constant 0 : i32
    %c0_i32_0 = arith.constant 0 : i32
    %c0_i32_1 = arith.constant 0 : i32
    return %c0_i32, %c0_i32_0 : i32, i32
  }
  func.func @transform_3(%arg0: i32, %arg1: i32) -> (i32, i32) {
    %c0_i32 = arith.constant 0 : i32
    %c0_i32_0 = arith.constant 0 : i32
    %c0_i32_1 = arith.constant 0 : i32
    return %c0_i32, %c0_i32_0 : i32, i32
  }
  func.func @transform_4(%arg0: i32, %arg1: i32) -> (i32, i32) {
    %c0_i32 = arith.constant 0 : i32
    %c0_i32_0 = arith.constant 0 : i32
    %c0_i32_1 = arith.constant 0 : i32
    return %c0_i32, %c0_i32_0 : i32, i32
  }
  func.func @transform_5(%arg0: i32, %arg1: i32) -> (i32, i32) {
    %c0_i32 = arith.constant 0 : i32
    %c0_i32_0 = arith.constant 0 : i32
    %c0_i32_1 = arith.constant 0 : i32
    return %c0_i32, %c0_i32_0 : i32, i32
  }
  func.func @transform_6(%arg0: i32, %arg1: i32) -> (i32, i32, i32) {
    %c0_i32 = arith.constant 0 : i32
    %c0_i32_0 = arith.constant 0 : i32
    return %arg0, %c0_i32, %arg1 : i32, i32, i32
  }
}

</mosaic_0001>

<llo_original>
// kernel: tpu_custom_call.1
$region0: #{tpu_custom_call.1}
  #allocation0 [shape = 'u32[]', space=smem, size = 0x4, offset = 0x4, fixed_abs, tag = 'smem constant byte address 0x4 - core index']
  #allocation1 [shape = 'u32[144,128]{1,0:T(1,128)}', space=vmem, size = 0x12000, scoped, tag = 'internal scratch']
  %s0 = inlined_call_operand.vmem [shape: f32[2,64,256], index: 0, kind: input, shape index: {}]
  %s1 = inlined_call_operand.vmem [shape: f32[2,64,1], index: 1, kind: input, shape index: {}]
  %s2 = inlined_call_operand.vmem [shape: f32[16,64], index: 2, kind: input, shape index: {}]
  %s3 = inlined_call_operand.vmem [shape: f32[16,1], index: 3, kind: input, shape index: {}]
  %s4 = inlined_call_operand.vmem [shape: f32[64,16], index: 4, kind: input, shape index: {}]
  %s5 = inlined_call_operand.vmem [shape: f32[64,1], index: 5, kind: input, shape index: {}]
  %s6 = inlined_call_operand.hbm [shape: f32[2,64,256], index: 6, kind: output, shape index: {}]
  %s7 = sld [smem:[#allocation0]]
  $region57: #{tpu_custom_call.1} parent=0
    _
  %s9 = ssub.s32 1, %s7
  %s10 = scalar_select 0, %s9, %s7
  $region1: #{tpu_custom_call.1} parent=0
    #allocation2 [shape = 'u8[131072]{0}', space=vmem, size = 0x20000, scoped, tag = 'output window, operand 0']
    #allocation3 [shape = 's32[2]{0}', space=sflag, size = 0x8, scoped, tag = 'scoped memory for tpu_custom_call.1']
    %11 = vsyncpa [#allocation3], 0
    %s12 = scalar_lea.sflag [#allocation3], 1
    %13 = vsyncpa %s12, 0
    loop: start=0, step=1, limit=4
    $region2: #{tpu_custom_call.1} parent=1 // loop_pre_header
      _
    $region3: #{tpu_custom_call.1} parent=1 // loop_header
      %s15 = sphi 0, %s19
      %p16 = scmp.ge.s32.totalorder %s15, 4
      %s22 = sphi 0, %s34
      %s23 = sphi 0, %s30
      %s24 = sphi 0, %s22
      %s25 = sphi 0, %s23
      %s26 = sphi 0, %s24
      %s27 = sphi 0, %s25
      %s39 = sphi 0, %s41
      %s42 = sphi 0, %s39
      %s43 = sphi 0, %s42
      %s59 = sphi 0, %s43
      %s65 = sphi 0, %s67
      %s68 = sphi 0, %s65
      %s69 = sphi 0, %s68
      %s85 = sphi 0, %s69
      %s89 = sphi 0, %s89
      %s91 = sphi 0, %s89
      %s92 = sphi 0, %s91
      %s106 = sphi 0, %s92
      %s110 = sphi 0, %s110
      %s112 = sphi 0, %s110
      %s113 = sphi 0, %s112
      %s127 = sphi 0, %s113
      %s131 = sphi 0, %s131
      %s133 = sphi 0, %s131
      %s134 = sphi 0, %s133
      %s148 = sphi 0, %s134
      %s152 = sphi 0, %s152
      %s154 = sphi 0, %s152
      %s155 = sphi 0, %s154
      %s169 = sphi 0, %s155
      %s177 = sphi 0, %s179
      %s180 = sphi 0, %s177
      %s181 = sphi 0, %s180
      %s197 = sphi 0, %s181
    $region4: #{tpu_custom_call.1} parent=1 // loop_header_branch
      %18 = sbr.rel (%p16) target = $region8
    $region5: #{tpu_custom_call.1} parent=1 // loop_body
      %s20 = ssub.s32 %s15, 1
      %s21 = ssub.s32 %s15, 2
      %s28 = sadd.s32 1, %s23
      %p29 = scmp.ge.s32.totalorder %s28, 1
      %s30 = scalar_select %p29, 0, %s28
      %s31 = sadd.s32 1, %s22
      %s32 = scalar_select %p29, %s31, %s22
      %p33 = scmp.ge.s32.totalorder %s32, 2
      %s34 = scalar_select %p33, 0, %s32
      %s35 = ssub.s32 %s22, %s34
      %s36 = ssub.s32 %s23, %s30
      %s37 = sor.u32 %s35, %s36
      %p38 = scmp.eq.s32.totalorder %s37, 0
      %s40 = sadd.s32 %s39, 1
      %s41 = scalar_select %p38, %s39, %s40
      %p44 = pneg %p38
      %p45 = scmp.eq.s32.totalorder %s15, 1
      %p46 = por %p44, %p45
      %p47 = scmp.ne.s32.totalorder %s39, %s42
      %p48 = scmp.eq.s32.totalorder %s15, 0
      %p49 = por %p47, %p48
      %p50 = scmp.ne.s32.totalorder %s39, %s42
      %p51 = scmp.eq.s32.totalorder %s20, 1
      %p52 = por %p50, %p51
      %p53 = scmp.ne.s32.totalorder %s42, %s43
      %p54 = scmp.eq.s32.totalorder %s20, 0
      %p55 = por %p53, %p54
      %p56 = scmp.ne.s32.totalorder %s42, %s43
      %p57 = scmp.eq.s32.totalorder %s21, 1
      %p58 = por %p56, %p57
      %p60 = scmp.ne.s32.totalorder %s43, %s59
      %p61 = scmp.eq.s32.totalorder %s21, 0
      %p62 = por %p60, %p61
      %s63 = ssub.s32 %s22, %s34
      %p64 = scmp.eq.s32.totalorder %s63, 0
      %s66 = sadd.s32 %s65, 1
      %s67 = scalar_select %p64, %s65, %s66
      %p70 = pneg %p64
      %p71 = scmp.eq.s32.totalorder %s15, 1
      %p72 = por %p70, %p71
      %p73 = scmp.ne.s32.totalorder %s65, %s68
      %p74 = scmp.eq.s32.totalorder %s15, 0
      %p75 = por %p73, %p74
      %p76 = scmp.ne.s32.totalorder %s65, %s68
      %p77 = scmp.eq.s32.totalorder %s20, 1
      %p78 = por %p76, %p77
      %p79 = scmp.ne.s32.totalorder %s68, %s69
      %p80 = scmp.eq.s32.totalorder %s20, 0
      %p81 = por %p79, %p80
      %p82 = scmp.ne.s32.totalorder %s68, %s69
      %p83 = scmp.eq.s32.totalorder %s21, 1
      %p84 = por %p82, %p83
      %p86 = scmp.ne.s32.totalorder %s69, %s85
      %p87 = scmp.eq.s32.totalorder %s21, 0
      %p88 = por %p86, %p87
      %s90 = sadd.s32 %s89, 1
      %p93 = scmp.eq.s32.totalorder %s15, 1
      %p94 = scmp.ne.s32.totalorder %s89, %s91
      %p95 = scmp.eq.s32.totalorder %s15, 0
      %p96 = por %p94, %p95
      %p97 = scmp.ne.s32.totalorder %s89, %s91
      %p98 = scmp.eq.s32.totalorder %s20, 1
      %p99 = por %p97, %p98
      %p100 = scmp.ne.s32.totalorder %s91, %s92
      %p101 = scmp.eq.s32.totalorder %s20, 0
      %p102 = por %p100, %p101
      %p103 = scmp.ne.s32.totalorder %s91, %s92
      %p104 = scmp.eq.s32.totalorder %s21, 1
      %p105 = por %p103, %p104
      %p107 = scmp.ne.s32.totalorder %s92, %s106
      %p108 = scmp.eq.s32.totalorder %s21, 0
      %p109 = por %p107, %p108
      %s111 = sadd.s32 %s110, 1
      %p114 = scmp.eq.s32.totalorder %s15, 1
      %p115 = scmp.ne.s32.totalorder %s110, %s112
      %p116 = scmp.eq.s32.totalorder %s15, 0
      %p117 = por %p115, %p116
      %p118 = scmp.ne.s32.totalorder %s110, %s112
      %p119 = scmp.eq.s32.totalorder %s20, 1
      %p120 = por %p118, %p119
      %p121 = scmp.ne.s32.totalorder %s112, %s113
      %p122 = scmp.eq.s32.totalorder %s20, 0
      %p123 = por %p121, %p122
      %p124 = scmp.ne.s32.totalorder %s112, %s113
      %p125 = scmp.eq.s32.totalorder %s21, 1
      %p126 = por %p124, %p125
      %p128 = scmp.ne.s32.totalorder %s113, %s127
      %p129 = scmp.eq.s32.totalorder %s21, 0
      %p130 = por %p128, %p129
      %s132 = sadd.s32 %s131, 1
      %p135 = scmp.eq.s32.totalorder %s15, 1
      %p136 = scmp.ne.s32.totalorder %s131, %s133
      %p137 = scmp.eq.s32.totalorder %s15, 0
      %p138 = por %p136, %p137
      %p139 = scmp.ne.s32.totalorder %s131, %s133
      %p140 = scmp.eq.s32.totalorder %s20, 1
      %p141 = por %p139, %p140
      %p142 = scmp.ne.s32.totalorder %s133, %s134
      %p143 = scmp.eq.s32.totalorder %s20, 0
      %p144 = por %p142, %p143
      %p145 = scmp.ne.s32.totalorder %s133, %s134
      %p146 = scmp.eq.s32.totalorder %s21, 1
      %p147 = por %p145, %p146
      %p149 = scmp.ne.s32.totalorder %s134, %s148
      %p150 = scmp.eq.s32.totalorder %s21, 0
      %p151 = por %p149, %p150
      %s153 = sadd.s32 %s152, 1
      %p156 = scmp.eq.s32.totalorder %s15, 1
      %p157 = scmp.ne.s32.totalorder %s152, %s154
      %p158 = scmp.eq.s32.totalorder %s15, 0
      %p159 = por %p157, %p158
      %p160 = scmp.ne.s32.totalorder %s152, %s154
      %p161 = scmp.eq.s32.totalorder %s20, 1
      %p162 = por %p160, %p161
      %p163 = scmp.ne.s32.totalorder %s154, %s155
      %p164 = scmp.eq.s32.totalorder %s20, 0
      %p165 = por %p163, %p164
      %p166 = scmp.ne.s32.totalorder %s154, %s155
      %p167 = scmp.eq.s32.totalorder %s21, 1
      %p168 = por %p166, %p167
      %p170 = scmp.ne.s32.totalorder %s155, %s169
      %p171 = scmp.eq.s32.totalorder %s21, 0
      %p172 = por %p170, %p171
      %s173 = ssub.s32 %s22, %s34
      %s174 = ssub.s32 %s23, %s30
      %s175 = sor.u32 %s173, %s174
      %p176 = scmp.eq.s32.totalorder %s175, 0
      %s178 = sadd.s32 %s177, 1
      %s179 = scalar_select %p176, %s177, %s178
      %p182 = pneg %p176
      %p183 = scmp.eq.s32.totalorder %s15, 1
      %p184 = por %p182, %p183
      %p185 = scmp.ne.s32.totalorder %s177, %s180
      %p186 = scmp.eq.s32.totalorder %s15, 0
      %p187 = por %p185, %p186
      %p188 = scmp.ne.s32.totalorder %s177, %s180
      %p189 = scmp.eq.s32.totalorder %s20, 1
      %p190 = por %p188, %p189
      %p191 = scmp.ne.s32.totalorder %s180, %s181
      %p192 = scmp.eq.s32.totalorder %s20, 0
      %p193 = por %p191, %p192
      %p194 = scmp.ne.s32.totalorder %s180, %s181
      %p195 = scmp.eq.s32.totalorder %s21, 1
      %p196 = por %p194, %p195
      %p198 = scmp.ne.s32.totalorder %s181, %s197
      %p199 = scmp.eq.s32.totalorder %s21, 0
      %p200 = por %p198, %p199
      %p201 = scmp.le.s32.totalorder 1, %s15
      %p202 = scmp.lt.s32.totalorder %s15, 3
      %p203 = pnand %p201, %p202
      %p204 = pneg %p203
      // Predicated region
      $region9: #{tpu_custom_call.1} parent=5 // pred_check
        _
      $region10: #{tpu_custom_call.1} parent=5 // pred_check_branch
        %206 = sbr.rel (%p203) target = $region12
      $region11: #{tpu_custom_call.1} parent=5 // pred_region
        %s207 = ssub.s32 %s15, 1
        // Predicated region
        $region13: #{tpu_custom_call.1} parent=11 // pred_check
          %p208 = pneg %p102
        $region14: #{tpu_custom_call.1} parent=11 // pred_check_branch
          %210 = sbr.rel (%p208) target = $region16
        $region15: #{tpu_custom_call.1} parent=11 // pred_region
          _
        $region16: #{tpu_custom_call.1} parent=11 // pred_fallthru
          _
        // Predicated region
        $region17: #{tpu_custom_call.1} parent=11 // pred_check
          %p211 = pneg %p123
        $region18: #{tpu_custom_call.1} parent=11 // pred_check_branch
          %213 = sbr.rel (%p211) target = $region20
        $region19: #{tpu_custom_call.1} parent=11 // pred_region
          _
        $region20: #{tpu_custom_call.1} parent=11 // pred_fallthru
          _
        // Predicated region
        $region21: #{tpu_custom_call.1} parent=11 // pred_check
          %p214 = pneg %p144
        $region22: #{tpu_custom_call.1} parent=11 // pred_check_branch
          %216 = sbr.rel (%p214) target = $region24
        $region23: #{tpu_custom_call.1} parent=11 // pred_region
          _
        $region24: #{tpu_custom_call.1} parent=11 // pred_fallthru
          _
        // Predicated region
        $region25: #{tpu_custom_call.1} parent=11 // pred_check
          %p217 = pneg %p165
        $region26: #{tpu_custom_call.1} parent=11 // pred_check_branch
          %219 = sbr.rel (%p217) target = $region28
        $region27: #{tpu_custom_call.1} parent=11 // pred_region
          _
        $region28: #{tpu_custom_call.1} parent=11 // pred_fallthru
          _
      $region12: #{tpu_custom_call.1} parent=5 // pred_fallthru
        _
      %p220 = scmp.lt.s32.totalorder %s15, 2
      // Predicated region
      $region29: #{tpu_custom_call.1} parent=5 // pred_check
        %p221 = pneg %p220
      $region30: #{tpu_custom_call.1} parent=5 // pred_check_branch
        %223 = sbr.rel (%p221) target = $region32
      $region31: #{tpu_custom_call.1} parent=5 // pred_region
        // Predicated region
        $region33: #{tpu_custom_call.1} parent=31 // pred_check
          %p224 = pneg %p49
        $region34: #{tpu_custom_call.1} parent=31 // pred_check_branch
          %226 = sbr.rel (%p224) target = $region36
        $region35: #{tpu_custom_call.1} parent=31 // pred_region
          %s227 = smul.u32 2, %s23
          %p228 = scmp.lt.s32.totalorder %s22, 1
          %s229 = scalar_select %p228, %s22, 1
          %p230 = scmp.lt.s32.totalorder %s227, 1
          %s231 = scalar_select %p230, %s227, 1
          %s232 = smul.addr %s229, 16
          %s233 = sadd.s32 %s231, %s232
          %s234 = smul.addr %s233, 8
          %s235 = scalar_lea.vmem %s0, %s234
          %s236 = smul.u32 2, %s23
        $region36: #{tpu_custom_call.1} parent=31 // pred_fallthru
          _
        // Predicated region
        $region37: #{tpu_custom_call.1} parent=31 // pred_check
          %p237 = pneg %p75
        $region38: #{tpu_custom_call.1} parent=31 // pred_check_branch
          %239 = sbr.rel (%p237) target = $region40
        $region39: #{tpu_custom_call.1} parent=31 // pred_region
          %p240 = scmp.lt.s32.totalorder %s22, 1
          %s241 = scalar_select %p240, %s22, 1
          %s242 = smul.addr %s241, 8
          %s243 = smul.addr %s242, 8
          %s244 = scalar_lea.vmem %s1, %s243
        $region40: #{tpu_custom_call.1} parent=31 // pred_fallthru
          _
      $region32: #{tpu_custom_call.1} parent=5 // pred_fallthru
        _
      %p245 = scmp.le.s32.totalorder 1, %s15
      %p246 = scmp.lt.s32.totalorder %s15, 3
      %p247 = pnand %p245, %p246
      %p248 = pneg %p247
      // Predicated region
      $region41: #{tpu_custom_call.1} parent=5 // pred_check
        _
      $region42: #{tpu_custom_call.1} parent=5 // pred_check_branch
        %250 = sbr.rel (%p247) target = $region44
      $region43: #{tpu_custom_call.1} parent=5 // pred_region
        %s251 = ssub.s32 %s15, 1
        %s252 = smul.u32 2, %s25
        %p253 = scmp.lt.s32.totalorder %s24, 1
        %s254 = scalar_select %p253, %s24, 1
        %p255 = scmp.lt.s32.totalorder %s252, 1
        %s256 = scalar_select %p255, %s252, 1
        %s257 = smul.addr %s254, 16
        %s258 = sadd.s32 %s256, %s257
        %s259 = smul.addr %s258, 8
        %s260 = scalar_lea.vmem %s0, %s259
        %p261 = pneg %p55
        %p262 = pneg %p52
        %p263 = scmp.lt.s32.totalorder %s24, 1
        %s264 = scalar_select %p263, %s24, 1
        %s265 = smul.addr %s264, 8
        %s266 = smul.addr %s265, 8
        %s267 = scalar_lea.vmem %s1, %s266
        %p268 = pneg %p81
        %p269 = pneg %p78
        %p270 = pneg %p102
        %p271 = pneg %p99
        %p272 = pneg %p123
        %p273 = pneg %p120
        %p274 = pneg %p144
        %p275 = pneg %p141
        %p276 = pneg %p165
        %p277 = pneg %p162
        %p278 = pneg %p193
        %p279 = pneg %p190
        %s280 = sand.u32 %s180, 1
        %s281 = scalar_lea.sflag [#allocation3], %s280
        %s282 = sand.u32 %s180, 1
        %s283 = smul.addr %s282, 128
        %s284 = scalar_lea.vmem [#allocation2], %s283
        %s285 = smul.u32 2, %s25
        %p286 = scmp.lt.s32.totalorder %s24, 1
        %s287 = scalar_select %p286, %s24, 1
        %p288 = scmp.lt.s32.totalorder %s285, 1
        %s289 = scalar_select %p288, %s285, 1
        %s290 = smul.addr %s287, 16
        %s291 = sadd.s32 %s289, %s290
        %s292 = smul.addr %s291, 8
        %s293 = scalar_lea.vmem %s0, %s292
        %s294 = smul.u32 2, %s25
        %p295 = scmp.lt.s32.totalorder %s24, 1
        %s296 = scalar_select %p295, %s24, 1
        %s297 = smul.addr %s296, 8
        %s298 = smul.addr %s297, 8
        %s299 = scalar_lea.vmem %s1, %s298
        %s300 = smul.u32 2, %s25
        %v301 = vld [vmem:[%s293] sm:$0xff]
        %v302 = vld [vmem:[%s293 + $0x8] sm:$0xff]
        %v303 = vld [vmem:[%s293 + $0x10] sm:$0xff]
        %v304 = vld [vmem:[%s293 + $0x18] sm:$0xff]
        %v305 = vld [vmem:[%s293 + $0x20] sm:$0xff]
        %v306 = vld [vmem:[%s293 + $0x28] sm:$0xff]
        %v307 = vld [vmem:[%s293 + $0x30] sm:$0xff]
        %v308 = vld [vmem:[%s293 + $0x38] sm:$0xff]
        %v309 = vld [vmem:[%s293 + $0x40] sm:$0xff]
        %v310 = vld [vmem:[%s293 + $0x48] sm:$0xff]
        %v311 = vld [vmem:[%s293 + $0x50] sm:$0xff]
        %v312 = vld [vmem:[%s293 + $0x58] sm:$0xff]
        %v313 = vld [vmem:[%s293 + $0x60] sm:$0xff]
        %v314 = vld [vmem:[%s293 + $0x68] sm:$0xff]
        %v315 = vld [vmem:[%s293 + $0x70] sm:$0xff]
        %v316 = vld [vmem:[%s293 + $0x78] sm:$0xff]
        %v317 = vld [vmem:[%s2] sm:$0xff]
        %v318 = vld [vmem:[%s2 + $0x8] sm:$0xff]
        %v319 = vld [vmem:[%s3] sm:$0xff]
        %v320 = vld [vmem:[%s3 + $0x8] sm:$0xff]
        %322 = vset.pattern.permute.xlu0 0
        %323 = vperm.xlu0 %322, %v319
        %v324 = vpop.permute.xlu0 %323
        %327 = vset.pattern.permute.xlu0 0
        %328 = vperm.xlu0 %327, %v320
        %v329 = vpop.permute.xlu0 %328
        %vm331 = vcmask 523264
        %v333 = vsel %vm331, %v317, 0
        %v336 = vsel %vm331, %v318, 0
        %338 = vmatprep.subr.mxu0 %v302
        %339 = vmatpush1.msra.mxu0 %v301
        %340 = vmatprep.subr.mxu0 %v304
        %341 = vmatpush1.msra.mxu0 %v303
        %342 = vmatprep.subr.mxu0 %v306
        %343 = vmatpush1.msra.mxu0 %v305
        %344 = vmatprep.subr.mxu0 %v308
        %345 = vmatpush1.msra.mxu0 %v307
        %346 = vmatprep.subr.mxu0 %v310
        %347 = vmatpush1.msra.mxu0 %v309
        %348 = vmatprep.subr.mxu0 %v312
        %349 = vmatpush1.msra.mxu0 %v311
        %350 = vmatprep.subr.mxu0 %v314
        %351 = vmatpush1.msra.mxu0 %v313
        %352 = vmatprep.subr.mxu0 %v316
        %353 = vmatpush1.msra.mxu0 %v315
        %354 = vmatprep.subr.mxu0 0.0
        %355 = vmatpush1.msra.mxu0 0.0
        %356 = vmatprep.subr.mxu0 0.0
        %357 = vmatpush1.msra.mxu0 0.0
        %358 = vmatprep.subr.mxu0 0.0
        %359 = vmatpush1.msra.mxu0 0.0
        %360 = vmatprep.subr.mxu0 0.0
        %361 = vmatpush1.msra.mxu0 0.0
        %362 = vmatprep.subr.mxu0 0.0
        %363 = vmatpush1.msra.mxu0 0.0
        %364 = vmatprep.subr.mxu0 0.0
        %365 = vmatpush1.msra.mxu0 0.0
        %366 = vmatprep.subr.mxu0 0.0
        %367 = vmatpush1.msra.mxu0 0.0
        %368 = vmatprep.subr.mxu0 0.0
        %369 = vmatpush1.msra.mxu0 0.0
        %370 = vmatprep.subr.mxu0 0.0
        %371 = vmatpush1.msra.mxu0 0.0
        %372 = vmatprep.subr.mxu0 0.0
        %373 = vmatpush1.msra.mxu0 0.0
        %374 = vmatprep.subr.mxu0 0.0
        %375 = vmatpush1.msra.mxu0 0.0
        %376 = vmatprep.subr.mxu0 0.0
        %377 = vmatpush1.msra.mxu0 0.0
        %378 = vmatprep.subr.mxu0 0.0
        %379 = vmatpush1.msra.mxu0 0.0
        %380 = vmatprep.subr.mxu0 0.0
        %381 = vmatpush1.msra.mxu0 0.0
        %382 = vmatprep.subr.mxu0 0.0
        %383 = vmatpush1.msra.mxu0 0.0
        %384 = vmatprep.subr.mxu0 0.0
        %385 = vmatpush1.msra.mxu0 0.0
        %386 = vmatprep.subr.mxu0 0.0
        %387 = vmatpush1.msra.mxu0 0.0
        %388 = vmatprep.subr.mxu0 0.0
        %389 = vmatpush1.msra.mxu0 0.0
        %390 = vmatprep.subr.mxu0 0.0
        %391 = vmatpush1.msra.mxu0 0.0
        %392 = vmatprep.subr.mxu0 0.0
        %393 = vmatpush1.msra.mxu0 0.0
        %394 = vmatprep.subr.mxu0 0.0
        %395 = vmatpush1.msra.mxu0 0.0
        %396 = vmatprep.subr.mxu0 0.0
        %397 = vmatpush1.msra.mxu0 0.0
        %398 = vmatprep.subr.mxu0 0.0
        %399 = vmatpush1.msra.mxu0 0.0
        %400 = vmatprep.subr.mxu0 0.0
        %401 = vmatpush1.msra.mxu0 0.0
        %402 = vmatprep.mubr.f32.mxu0 0.0
        %403 = vmatmul.mubr.f32.gmra.mrb[0].mxu0 %v333
        %v404 = vpop.f32.mrb[0].mxu0
        %v405 = vadd.f32 %v324, %v404
        %v406 = vpop.f32.mrb[0].mxu0
        %v407 = vadd.f32 %v324, %v406
        %408 = vmatprep.mubr.f32.mxu0 0.0
        %409 = vmatmul.mubr.f32.gmra.mrb[0].mxu0 %v336
        %v410 = vpop.f32.mrb[0].mxu0
        %v411 = vadd.f32 %v329, %v410
        %v412 = vpop.f32.mrb[0].mxu0
        %v413 = vadd.f32 %v329, %v412
        %414 = vdwg.mxu0
        %v415 = vmax.f32 %v405, 0.0
        %v416 = vmax.f32 %v407, 0.0
        %v417 = vmax.f32 %v411, 0.0
        %v418 = vmax.f32 %v413, 0.0
        %v419 = vld [vmem:[%s4] sm:$0xff]
        %v420 = vld [vmem:[%s4 + $0x8] sm:$0xff]
        %v421 = vld [vmem:[%s4 + $0x10] sm:$0xff]
        %v422 = vld [vmem:[%s4 + $0x18] sm:$0xff]
        %v423 = vld [vmem:[%s4 + $0x20] sm:$0xff]
        %v424 = vld [vmem:[%s4 + $0x28] sm:$0xff]
        %v425 = vld [vmem:[%s4 + $0x30] sm:$0xff]
        %v426 = vld [vmem:[%s4 + $0x38] sm:$0xff]
        %v427 = vld [vmem:[%s5] sm:$0xff]
        %v428 = vld [vmem:[%s5 + $0x8] sm:$0xff]
        %v429 = vld [vmem:[%s5 + $0x10] sm:$0xff]
        %v430 = vld [vmem:[%s5 + $0x18] sm:$0xff]
        %v431 = vld [vmem:[%s5 + $0x20] sm:$0xff]
        %v432 = vld [vmem:[%s5 + $0x28] sm:$0xff]
        %v433 = vld [vmem:[%s5 + $0x30] sm:$0xff]
        %v434 = vld [vmem:[%s5 + $0x38] sm:$0xff]
        %436 = vset.pattern.permute.xlu0 0
        %437 = vperm.xlu0 %436, %v427
        %v438 = vpop.permute.xlu0 %437
        %441 = vset.pattern.permute.xlu0 0
        %442 = vperm.xlu0 %441, %v428
        %v443 = vpop.permute.xlu0 %442
        %446 = vset.pattern.permute.xlu0 0
        %447 = vperm.xlu0 %446, %v429
        %v448 = vpop.permute.xlu0 %447
        %451 = vset.pattern.permute.xlu0 0
        %452 = vperm.xlu0 %451, %v430
        %v453 = vpop.permute.xlu0 %452
        %456 = vset.pattern.permute.xlu0 0
        %457 = vperm.xlu0 %456, %v431
        %v458 = vpop.permute.xlu0 %457
        %461 = vset.pattern.permute.xlu0 0
        %462 = vperm.xlu0 %461, %v432
        %v463 = vpop.permute.xlu0 %462
        %466 = vset.pattern.permute.xlu0 0
        %467 = vperm.xlu0 %466, %v433
        %v468 = vpop.permute.xlu0 %467
        %471 = vset.pattern.permute.xlu0 0
        %472 = vperm.xlu0 %471, %v434
        %v473 = vpop.permute.xlu0 %472
        %vm475 = vcmask 130048
        %v477 = vsel %vm475, %v419, 0
        %v480 = vsel %vm475, %v420, 0
        %v483 = vsel %vm475, %v421, 0
        %v486 = vsel %vm475, %v422, 0
        %v489 = vsel %vm475, %v423, 0
        %v492 = vsel %vm475, %v424, 0
        %v495 = vsel %vm475, %v425, 0
        %v498 = vsel %vm475, %v426, 0
        %500 = vmatprep.subr.mxu0 %v416
        %501 = vmatpush1.msra.mxu0 %v415
        %502 = vmatprep.subr.mxu0 %v418
        %503 = vmatpush1.msra.mxu0 %v417
        %504 = vmatprep.subr.mxu0 0.0
        %505 = vmatpush1.msra.mxu0 0.0
        %506 = vmatprep.subr.mxu0 0.0
        %507 = vmatpush1.msra.mxu0 0.0
        %508 = vmatprep.subr.mxu0 0.0
        %509 = vmatpush1.msra.mxu0 0.0
        %510 = vmatprep.subr.mxu0 0.0
        %511 = vmatpush1.msra.mxu0 0.0
        %512 = vmatprep.subr.mxu0 0.0
        %513 = vmatpush1.msra.mxu0 0.0
        %514 = vmatprep.subr.mxu0 0.0
        %515 = vmatpush1.msra.mxu0 0.0
        %516 = vmatprep.subr.mxu0 0.0
        %517 = vmatpush1.msra.mxu0 0.0
        %518 = vmatprep.subr.mxu0 0.0
        %519 = vmatpush1.msra.mxu0 0.0
        %520 = vmatprep.subr.mxu0 0.0
        %521 = vmatpush1.msra.mxu0 0.0
        %522 = vmatprep.subr.mxu0 0.0
        %523 = vmatpush1.msra.mxu0 0.0
        %524 = vmatprep.subr.mxu0 0.0
        %525 = vmatpush1.msra.mxu0 0.0
        %526 = vmatprep.subr.mxu0 0.0
        %527 = vmatpush1.msra.mxu0 0.0
        %528 = vmatprep.subr.mxu0 0.0
        %529 = vmatpush1.msra.mxu0 0.0
        %530 = vmatprep.subr.mxu0 0.0
        %531 = vmatpush1.msra.mxu0 0.0
        %532 = vmatprep.subr.mxu0 0.0
        %533 = vmatpush1.msra.mxu0 0.0
        %534 = vmatprep.subr.mxu0 0.0
        %535 = vmatpush1.msra.mxu0 0.0
        %536 = vmatprep.subr.mxu0 0.0
        %537 = vmatpush1.msra.mxu0 0.0
        %538 = vmatprep.subr.mxu0 0.0
        %539 = vmatpush1.msra.mxu0 0.0
        %540 = vmatprep.subr.mxu0 0.0
        %541 = vmatpush1.msra.mxu0 0.0
        %542 = vmatprep.subr.mxu0 0.0
        %543 = vmatpush1.msra.mxu0 0.0
        %544 = vmatprep.subr.mxu0 0.0
        %545 = vmatpush1.msra.mxu0 0.0
        %546 = vmatprep.subr.mxu0 0.0
        %547 = vmatpush1.msra.mxu0 0.0
        %548 = vmatprep.subr.mxu0 0.0
        %549 = vmatpush1.msra.mxu0 0.0
        %550 = vmatprep.subr.mxu0 0.0
        %551 = vmatpush1.msra.mxu0 0.0
        %552 = vmatprep.subr.mxu0 0.0
        %553 = vmatpush1.msra.mxu0 0.0
        %554 = vmatprep.subr.mxu0 0.0
        %555 = vmatpush1.msra.mxu0 0.0
        %556 = vmatprep.subr.mxu0 0.0
        %557 = vmatpush1.msra.mxu0 0.0
        %558 = vmatprep.subr.mxu0 0.0
        %559 = vmatpush1.msra.mxu0 0.0
        %560 = vmatprep.subr.mxu0 0.0
        %561 = vmatpush1.msra.mxu0 0.0
        %562 = vmatprep.subr.mxu0 0.0
        %563 = vmatpush1.msra.mxu0 0.0
        %564 = vmatprep.mubr.f32.mxu0 0.0
        %565 = vmatmul.mubr.f32.gmra.mrb[0].mxu0 %v477
        %v566 = vpop.f32.mrb[0].mxu0
        %v567 = vadd.f32 %v438, %v566
        %v568 = vpop.f32.mrb[0].mxu0
        %v569 = vadd.f32 %v438, %v568
        %570 = vmatprep.mubr.f32.mxu0 0.0
        %571 = vmatmul.mubr.f32.gmra.mrb[0].mxu0 %v480
        %v572 = vpop.f32.mrb[0].mxu0
        %v573 = vadd.f32 %v443, %v572
        %v574 = vpop.f32.mrb[0].mxu0
        %v575 = vadd.f32 %v443, %v574
        %576 = vmatprep.mubr.f32.mxu0 0.0
        %577 = vmatmul.mubr.f32.gmra.mrb[0].mxu0 %v483
        %v578 = vpop.f32.mrb[0].mxu0
        %v579 = vadd.f32 %v448, %v578
        %v580 = vpop.f32.mrb[0].mxu0
        %v581 = vadd.f32 %v448, %v580
        %582 = vmatprep.mubr.f32.mxu0 0.0
        %583 = vmatmul.mubr.f32.gmra.mrb[0].mxu0 %v486
        %v584 = vpop.f32.mrb[0].mxu0
        %v585 = vadd.f32 %v453, %v584
        %v586 = vpop.f32.mrb[0].mxu0
        %v587 = vadd.f32 %v453, %v586
        %588 = vmatprep.mubr.f32.mxu0 0.0
        %589 = vmatmul.mubr.f32.gmra.mrb[0].mxu0 %v489
        %v590 = vpop.f32.mrb[0].mxu0
        %v591 = vadd.f32 %v458, %v590
        %v592 = vpop.f32.mrb[0].mxu0
        %v593 = vadd.f32 %v458, %v592
        %594 = vmatprep.mubr.f32.mxu0 0.0
        %595 = vmatmul.mubr.f32.gmra.mrb[0].mxu0 %v492
        %v596 = vpop.f32.mrb[0].mxu0
        %v597 = vadd.f32 %v463, %v596
        %v598 = vpop.f32.mrb[0].mxu0
        %v599 = vadd.f32 %v463, %v598
        %600 = vmatprep.mubr.f32.mxu0 0.0
        %601 = vmatmul.mubr.f32.gmra.mrb[0].mxu0 %v495
        %v602 = vpop.f32.mrb[0].mxu0
        %v603 = vadd.f32 %v468, %v602
        %v604 = vpop.f32.mrb[0].mxu0
        %v605 = vadd.f32 %v468, %v604
        %606 = vmatprep.mubr.f32.mxu0 0.0
        %607 = vmatmul.mubr.f32.gmra.mrb[0].mxu0 %v498
        %v608 = vpop.f32.mrb[0].mxu0
        %v609 = vadd.f32 %v473, %v608
        %v610 = vpop.f32.mrb[0].mxu0
        %v611 = vadd.f32 %v473, %v610
        %612 = vdwg.mxu0
        %v613 = vld [vmem:[%s299] sm:$0xff]
        %v614 = vld [vmem:[%s299 + $0x8] sm:$0xff]
        %v615 = vld [vmem:[%s299 + $0x10] sm:$0xff]
        %v616 = vld [vmem:[%s299 + $0x18] sm:$0xff]
        %v617 = vld [vmem:[%s299 + $0x20] sm:$0xff]
        %v618 = vld [vmem:[%s299 + $0x28] sm:$0xff]
        %v619 = vld [vmem:[%s299 + $0x30] sm:$0xff]
        %v620 = vld [vmem:[%s299 + $0x38] sm:$0xff]
        %622 = vset.pattern.permute.xlu0 0
        %623 = vperm.xlu0 %622, %v613
        %v624 = vpop.permute.xlu0 %623
        %627 = vset.pattern.permute.xlu0 0
        %628 = vperm.xlu0 %627, %v614
        %v629 = vpop.permute.xlu0 %628
        %632 = vset.pattern.permute.xlu0 0
        %633 = vperm.xlu0 %632, %v615
        %v634 = vpop.permute.xlu0 %633
        %637 = vset.pattern.permute.xlu0 0
        %638 = vperm.xlu0 %637, %v616
        %v639 = vpop.permute.xlu0 %638
        %642 = vset.pattern.permute.xlu0 0
        %643 = vperm.xlu0 %642, %v617
        %v644 = vpop.permute.xlu0 %643
        %647 = vset.pattern.permute.xlu0 0
        %648 = vperm.xlu0 %647, %v618
        %v649 = vpop.permute.xlu0 %648
        %652 = vset.pattern.permute.xlu0 0
        %653 = vperm.xlu0 %652, %v619
        %v654 = vpop.permute.xlu0 %653
        %657 = vset.pattern.permute.xlu0 0
        %658 = vperm.xlu0 %657, %v620
        %v659 = vpop.permute.xlu0 %658
        %v661 = vadd.f32 %v567, %v624
        %v662 = vadd.f32 %v569, %v624
        %v663 = vadd.f32 %v573, %v629
        %v664 = vadd.f32 %v575, %v629
        %v665 = vadd.f32 %v579, %v634
        %v666 = vadd.f32 %v581, %v634
        %v667 = vadd.f32 %v585, %v639
        %v668 = vadd.f32 %v587, %v639
        %v669 = vadd.f32 %v591, %v644
        %v670 = vadd.f32 %v593, %v644
        %v671 = vadd.f32 %v597, %v649
        %v672 = vadd.f32 %v599, %v649
        %v673 = vadd.f32 %v603, %v654
        %v674 = vadd.f32 %v605, %v654
        %v675 = vadd.f32 %v609, %v659
        %v676 = vadd.f32 %v611, %v659
        %v677 = vxor.u32 %v661, 2147483648
        %v678 = vxor.u32 %v662, 2147483648
        %v679 = vxor.u32 %v663, 2147483648
        %v680 = vxor.u32 %v664, 2147483648
        %v681 = vxor.u32 %v665, 2147483648
        %v682 = vxor.u32 %v666, 2147483648
        %v683 = vxor.u32 %v667, 2147483648
        %v684 = vxor.u32 %v668, 2147483648
        %v685 = vxor.u32 %v669, 2147483648
        %v686 = vxor.u32 %v670, 2147483648
        %v687 = vxor.u32 %v671, 2147483648
        %v688 = vxor.u32 %v672, 2147483648
        %v689 = vxor.u32 %v673, 2147483648
        %v690 = vxor.u32 %v674, 2147483648
        %v691 = vxor.u32 %v675, 2147483648
        %v692 = vxor.u32 %v676, 2147483648
        %v693 = vmul.f32 %v677, 1.442695
        %v694 = vpow.pop %v693
        %v695 = vmul.f32 %v678, 1.442695
        %v696 = vpow.pop %v695
        %v697 = vmul.f32 %v679, 1.442695
        %v698 = vpow.pop %v697
        %v699 = vmul.f32 %v680, 1.442695
        %v700 = vpow.pop %v699
        %v701 = vmul.f32 %v681, 1.442695
        %v702 = vpow.pop %v701
        %v703 = vmul.f32 %v682, 1.442695
        %v704 = vpow.pop %v703
        %v705 = vmul.f32 %v683, 1.442695
        %v706 = vpow.pop %v705
        %v707 = vmul.f32 %v684, 1.442695
        %v708 = vpow.pop %v707
        %v709 = vmul.f32 %v685, 1.442695
        %v710 = vpow.pop %v709
        %v711 = vmul.f32 %v686, 1.442695
        %v712 = vpow.pop %v711
        %v713 = vmul.f32 %v687, 1.442695
        %v714 = vpow.pop %v713
        %v715 = vmul.f32 %v688, 1.442695
        %v716 = vpow.pop %v715
        %v717 = vmul.f32 %v689, 1.442695
        %v718 = vpow.pop %v717
        %v719 = vmul.f32 %v690, 1.442695
        %v720 = vpow.pop %v719
        %v721 = vmul.f32 %v691, 1.442695
        %v722 = vpow.pop %v721
        %v723 = vmul.f32 %v692, 1.442695
        %v724 = vpow.pop %v723
        %v725 = vadd.f32 %v694, 1.0
        %v726 = vadd.f32 %v696, 1.0
        %v727 = vadd.f32 %v698, 1.0
        %v728 = vadd.f32 %v700, 1.0
        %v729 = vadd.f32 %v702, 1.0
        %v730 = vadd.f32 %v704, 1.0
        %v731 = vadd.f32 %v706, 1.0
        %v732 = vadd.f32 %v708, 1.0
        %v733 = vadd.f32 %v710, 1.0
        %v734 = vadd.f32 %v712, 1.0
        %v735 = vadd.f32 %v714, 1.0
        %v736 = vadd.f32 %v716, 1.0
        %v737 = vadd.f32 %v718, 1.0
        %v738 = vadd.f32 %v720, 1.0
        %v739 = vadd.f32 %v722, 1.0
        %v740 = vadd.f32 %v724, 1.0
        %v741 = vrcp.pop %v725
        %v742 = vmul.f32 1.0, %v741
        %v743 = vrcp.pop %v726
        %v744 = vmul.f32 1.0, %v743
        %v745 = vrcp.pop %v727
        %v746 = vmul.f32 1.0, %v745
        %v747 = vrcp.pop %v728
        %v748 = vmul.f32 1.0, %v747
        %v749 = vrcp.pop %v729
        %v750 = vmul.f32 1.0, %v749
        %v751 = vrcp.pop %v730
        %v752 = vmul.f32 1.0, %v751
        %v753 = vrcp.pop %v731
        %v754 = vmul.f32 1.0, %v753
        %v755 = vrcp.pop %v732
        %v756 = vmul.f32 1.0, %v755
        %v757 = vrcp.pop %v733
        %v758 = vmul.f32 1.0, %v757
        %v759 = vrcp.pop %v734
        %v760 = vmul.f32 1.0, %v759
        %v761 = vrcp.pop %v735
        %v762 = vmul.f32 1.0, %v761
        %v763 = vrcp.pop %v736
        %v764 = vmul.f32 1.0, %v763
        %v765 = vrcp.pop %v737
        %v766 = vmul.f32 1.0, %v765
        %v767 = vrcp.pop %v738
        %v768 = vmul.f32 1.0, %v767
        %v769 = vrcp.pop %v739
        %v770 = vmul.f32 1.0, %v769
        %v771 = vrcp.pop %v740
        %v772 = vmul.f32 1.0, %v771
        %773 = vst [vmem:[%s284] sm:$0xff] %v742
        %774 = vst [vmem:[%s284 + $0x8] sm:$0xff] %v744
        %775 = vst [vmem:[%s284 + $0x10] sm:$0xff] %v746
        %776 = vst [vmem:[%s284 + $0x18] sm:$0xff] %v748
        %777 = vst [vmem:[%s284 + $0x20] sm:$0xff] %v750
        %778 = vst [vmem:[%s284 + $0x28] sm:$0xff] %v752
        %779 = vst [vmem:[%s284 + $0x30] sm:$0xff] %v754
        %780 = vst [vmem:[%s284 + $0x38] sm:$0xff] %v756
        %781 = vst [vmem:[%s284 + $0x40] sm:$0xff] %v758
        %782 = vst [vmem:[%s284 + $0x48] sm:$0xff] %v760
        %783 = vst [vmem:[%s284 + $0x50] sm:$0xff] %v762
        %784 = vst [vmem:[%s284 + $0x58] sm:$0xff] %v764
        %785 = vst [vmem:[%s284 + $0x60] sm:$0xff] %v766
        %786 = vst [vmem:[%s284 + $0x68] sm:$0xff] %v768
        %787 = vst [vmem:[%s284 + $0x70] sm:$0xff] %v770
        %788 = vst [vmem:[%s284 + $0x78] sm:$0xff] %v772
        %s789 = sand.u32 %s180, 1
        %s790 = scalar_lea.sflag [#allocation3], %s789
        %s791 = sand.u32 %s180, 1
        %s792 = smul.addr %s791, 128
        %s793 = scalar_lea.vmem [#allocation2], %s792
        // Predicated region
        $region45: #{tpu_custom_call.1} parent=43 // pred_check
          %p794 = pneg %p190
        $region46: #{tpu_custom_call.1} parent=43 // pred_check_branch
          %796 = sbr.rel (%p794) target = $region48
        $region47: #{tpu_custom_call.1} parent=43 // pred_region
          %s797 = smul.u32 2, %s25
          %s799 = ssub.s32 2048, 2048
          %800 = vsyncadd %s790, %s799
          %s801 = smul.addr %s24, 16
          %s802 = sadd.s32 %s797, %s801
          %s803 = smul.addr %s802, 128
          %s804 = scalar_lea.hbm %s6, %s803
          %s805 = sshll.u32 %s793, 4
          %s806 = int_to_ptr.vmem [resolvable:$true] %s805
          %811 = dma.vmem_to_hbm [thread:$0]  %s806, 2048, %s804, %s790, 256, 256, 16
        $region48: #{tpu_custom_call.1} parent=43 // pred_fallthru
          _
      $region44: #{tpu_custom_call.1} parent=5 // pred_fallthru
        _
      %p812 = scmp.le.s32.totalorder 2, %s15
      // Predicated region
      $region49: #{tpu_custom_call.1} parent=5 // pred_check
        %p813 = pneg %p812
      $region50: #{tpu_custom_call.1} parent=5 // pred_check_branch
        %815 = sbr.rel (%p813) target = $region52
      $region51: #{tpu_custom_call.1} parent=5 // pred_region
        %s816 = ssub.s32 %s15, 2
        // Predicated region
        $region53: #{tpu_custom_call.1} parent=51 // pred_check
          %p817 = pneg %p196
        $region54: #{tpu_custom_call.1} parent=51 // pred_check_branch
          %819 = sbr.rel (%p817) target = $region56
        $region55: #{tpu_custom_call.1} parent=51 // pred_region
          %s820 = sand.u32 %s181, 1
          %s821 = scalar_lea.sflag [#allocation3], %s820
          %s822 = sand.u32 %s181, 1
          %s823 = smul.addr %s822, 128
          %s824 = scalar_lea.vmem [#allocation2], %s823
          %825 = dma.done %s821, 2048
        $region56: #{tpu_custom_call.1} parent=51 // pred_fallthru
          _
      $region52: #{tpu_custom_call.1} parent=5 // pred_fallthru
        _
    $region6: #{tpu_custom_call.1} parent=1 // loop_footer
      %s19 = sadd.s32 1, %s15
    $region7: #{tpu_custom_call.1} parent=1 // loop_footer_branch
      %14 = sbr.rel target = $region3
    $region8: #{tpu_custom_call.1} parent=1 // loop_exit
      _
    %826 = vsyncpa [#allocation3], 1
    %s827 = scalar_lea.sflag [#allocation3], 1
    %828 = vsyncpa %s827, 1

</llo_original>
